<compile_context>
chip_gen: v5e
topology: v5e:2x2
jax: 0.10.0
libtpu: 0.0.40
codegen_flags: <defaults>
</compile_context>

<pallas_src>
import functools

import jax
import jax.numpy as jnp
from jax.experimental import pallas as pl
from jax.experimental.pallas import tpu as pltpu


# ----------------------------------------------------------------------------
# Kernel: fused Linear_ResBlock forward for one tile of batch rows
# ----------------------------------------------------------------------------
def linear_resblock_kernel(x_ref, w1t_ref, b1_ref, wcat_ref, bcat_ref, out_ref,
                           *, mxu_dtype, precision):
    """x_ref: (Bt, Din); w1t_ref: (Din, Din); wcat_ref: (2*Din, Dout) = [Wres^T ; W2^T];
    b1_ref: (1, Din); bcat_ref: (1, Dout) = bres + b2; out_ref: (Bt, Dout)."""
    x = x_ref[...].astype(jnp.float32)                               # (Bt, Din) f32

    def mm(lhs, w_ref):
        # MXU matmul; operands in mxu_dtype (bf16 by default), f32 accumulation.
        return jnp.dot(lhs.astype(mxu_dtype), w_ref[...],
                       preferred_element_type=jnp.float32, precision=precision)

    # hidden branch: h = relu(conv1(relu(x)))
    h = jnp.maximum(x, 0.0)                                          # ReLU on VPU (f32)
    h = mm(h, w1t_ref) + b1_ref[...]                                 # (Bt, Din)
    h = jnp.maximum(h, 0.0)

    # fused output: conv_res(x) + conv2(h) = [x, h] @ [Wres^T ; W2^T] + (bres + b2)
    cat = jnp.concatenate([x, h], axis=-1)                           # (Bt, 2*Din)
    out = mm(cat, wcat_ref) + bcat_ref[...]                          # (Bt, Dout) f32
    out_ref[...] = out.astype(out_ref.dtype)


# ----------------------------------------------------------------------------
# One-time parameter preparation (hoisted out of the per-call wrapper)
# ----------------------------------------------------------------------------
def prepare_linear_resblock_params(params, mxu_dtype=jnp.bfloat16):
    """params use PyTorch nn.Linear layout (out_features, in_features)."""
    w1, b1 = jnp.asarray(params["w1"]), jnp.asarray(params["b1"])
    w2, b2 = jnp.asarray(params["w2"]), jnp.asarray(params["b2"])
    wr, br = jnp.asarray(params["wres"]), jnp.asarray(params["bres"])
    d_in = w1.shape[0]
    d_out = w2.shape[0]

    w1t = w1.T.astype(mxu_dtype)                                     # (Din, Din)
    # K-stacked output weight: [Wres^T ; W2^T] -> (2*Din, Dout)
    wcat = jnp.concatenate([wr.T, w2.T], axis=0).astype(mxu_dtype)
    b1r = b1.reshape(1, d_in).astype(jnp.float32)
    bcat = (br + b2).reshape(1, d_out).astype(jnp.float32)           # residual bias folded in
    return dict(w1t=w1t, wcat=wcat, b1=b1r, bcat=bcat,
                mxu_dtype=mxu_dtype, d_in=d_in, d_out=d_out)


# ----------------------------------------------------------------------------
# Wrapper
# ----------------------------------------------------------------------------
def linear_resblock_pallas(x, prepared, *, block_rows=256, out_dtype=None):
    """x: (B, Din).  prepared: output of prepare_linear_resblock_params."""
    w1t, wcat = prepared["w1t"], prepared["wcat"]
    b1, bcat = prepared["b1"], prepared["bcat"]
    mxu_dtype = prepared["mxu_dtype"]
    d_in, d_out = prepared["d_in"], prepared["d_out"]
    B = x.shape[0]
    out_dtype = out_dtype if out_dtype is not None else x.dtype

    # Row tiling: bt rows per grid step (amortizes ~0.35us/step and fills the MXU M dim).
    # Small batches use a single full-extent tile; large batches use a sublane-aligned
    # tile and a cdiv grid with a masked ragged final tile (no pad/slice HBM round trip).
    if B <= block_rows:
        bt = B
    else:
        bt = max(8, (block_rows // 8) * 8)
    grid = pl.cdiv(B, bt)

    # Explicit VMEM budget: single-buffered weights + double-buffered x/out tiles
    # + f32 intermediates, with headroom.  Capped at v7x's 64 MiB per TensorCore.
    wbytes = (w1t.size + wcat.size) * jnp.dtype(mxu_dtype).itemsize
    bbytes = (b1.size + bcat.size) * 4
    iobytes = 2 * bt * (d_in * x.dtype.itemsize + d_out * jnp.dtype(out_dtype).itemsize)
    scratch = 4 * bt * (3 * d_in + d_out)                            # f32 intermediates
    vmem_limit = int(min(wbytes + bbytes + iobytes + scratch + (8 << 20), 64 << 20))

    precision = (jax.lax.Precision.HIGHEST
                 if jnp.dtype(mxu_dtype) == jnp.dtype(jnp.float32) else None)

    kernel = functools.partial(linear_resblock_kernel,
                               mxu_dtype=mxu_dtype, precision=precision)

    return pl.pallas_call(
        kernel,
        out_shape=jax.ShapeDtypeStruct((B, d_out), out_dtype),
        grid=(grid,),
        in_specs=[
            pl.BlockSpec((bt, d_in), lambda i: (i, 0)),              # x rows (streamed)
            # constant-index weights/biases: keep resident, single-buffered
            pl.BlockSpec((d_in, d_in), lambda i: (0, 0),
                         pipeline_mode=pl.Buffered(1)),              # conv1 W^T
            pl.BlockSpec((1, d_in), lambda i: (0, 0),
                         pipeline_mode=pl.Buffered(1)),              # conv1 bias
            pl.BlockSpec((2 * d_in, d_out), lambda i: (0, 0),
                         pipeline_mode=pl.Buffered(1)),              # [Wres^T ; W2^T]
            pl.BlockSpec((1, d_out), lambda i: (0, 0),
                         pipeline_mode=pl.Buffered(1)),              # bres + b2
        ],
        out_specs=pl.BlockSpec((bt, d_out), lambda i: (i, 0)),
        compiler_params=pltpu.CompilerParams(
            dimension_semantics=("parallel",),                        # batch rows independent
            vmem_limit_bytes=vmem_limit,
        ),
    )(x, w1t, b1, wcat, bcat)


# ----------------------------------------------------------------------------
# Pure-JAX reference (mirrors the PyTorch forward exactly)
# ----------------------------------------------------------------------------
def linear_resblock_ref(x, params):
    hp = jax.lax.Precision.HIGHEST
    a = jnp.dot(x, params["wres"].T, precision=hp) + params["bres"]
    b = jax.nn.relu(x)
    b = jnp.dot(b, params["w1"].T, precision=hp) + params["b1"]
    b = jax.nn.relu(b)
    b = jnp.dot(b, params["w2"].T, precision=hp) + params["b2"]
    return a + b


def _winit(key, shape, fan_in):
    # PyTorch nn.Linear default init: U(-1/sqrt(fan_in), 1/sqrt(fan_in))
    bound = float(fan_in) ** -0.5
    return jax.random.uniform(key, shape, jnp.float32, -bound, bound)


# ----------------------------------------------------------------------------
if __name__ == "__main__":
    # Small shapes consistent with the module (Linear Din->Din, Din->Dout);
    # feature dims are multiples of 128 so all tiles are lane-dense.
    B, D_IN, D_OUT = 16, 256, 128

    key = jax.random.PRNGKey(0)
    ks = jax.random.split(key, 7)
    x = jax.random.normal(ks[0], (B, D_IN), dtype=jnp.float32)
    params = dict(
        w1=_winit(ks[1], (D_IN, D_IN), D_IN),    b1=_winit(ks[2], (D_IN,), D_IN),
        w2=_winit(ks[3], (D_OUT, D_IN), D_IN),   b2=_winit(ks[4], (D_OUT,), D_IN),
        wres=_winit(ks[5], (D_OUT, D_IN), D_IN), bres=_winit(ks[6], (D_OUT,), D_IN),
    )

    ref = jax.block_until_ready(linear_resblock_ref(x, params))
    scale = float(jnp.max(jnp.abs(ref)))

    # bf16 MXU operands (default, fast path on all generations); f32 elementwise/accum.
    prep_bf16 = prepare_linear_resblock_params(params, mxu_dtype=jnp.bfloat16)
    out = jax.block_until_ready(linear_resblock_pallas(x, prep_bf16))
    assert out.shape == (B, D_OUT), out.shape
    err = float(jnp.max(jnp.abs(out - ref)))
    assert err < 5e-2 * scale, f"bf16 path mismatch: max abs err {err} (scale {scale})"

    # f32 MXU path with Precision.HIGHEST (for accuracy-critical use).
    prep_f32 = prepare_linear_resblock_params(params, mxu_dtype=jnp.float32)
    out_f32 = jax.block_until_ready(linear_resblock_pallas(x, prep_f32))
    err_f32 = float(jnp.max(jnp.abs(out_f32 - ref)))
    assert err_f32 < 1e-3 * scale, f"f32 path mismatch: max abs err {err_f32} (scale {scale})"

    # Multi-step grid with a ragged final tile (no padding / no trailing slice).
    x2 = jax.random.normal(ks[0], (B + 4, D_IN), dtype=jnp.float32)   # 20 rows, bt=8 -> grid=3
    ref2 = linear_resblock_ref(x2, params)
    out2 = jax.block_until_ready(linear_resblock_pallas(x2, prep_bf16, block_rows=8))
    err2 = float(jnp.max(jnp.abs(out2 - ref2)))
    assert out2.shape == (B + 4, D_OUT), out2.shape
    assert err2 < 5e-2 * float(jnp.max(jnp.abs(ref2))), f"ragged-grid mismatch: {err2}"

    print("KERNEL_OK")
</pallas_src>

<mosaic_0001>
module attributes {stable_mosaic.version = 11 : i64} {
  func.func @linear_resblock_kernel(%arg0: i32, %arg1: memref<16x256xf32, #tpu.memory_space<vmem>>, %arg2: memref<256x256xbf16, #tpu.memory_space<vmem>>, %arg3: memref<1x256xf32, #tpu.memory_space<vmem>>, %arg4: memref<512x128xbf16, #tpu.memory_space<vmem>>, %arg5: memref<1x128xf32, #tpu.memory_space<vmem>>, %arg6: memref<16x128xf32, #tpu.memory_space<vmem>>) attributes {dimension_semantics = [#tpu.dimension_semantics<parallel>], iteration_bounds = array<i64: 1>, scalar_prefetch = 0 : i64, scratch_operands = 0 : i64, tpu.core_type = #tpu.core_type<tc>, window_params = [{transform_indices = @transform_0, window_bounds = array<i64: 16, 256>}, {pipeline_mode = #tpu.pipeline_mode<synchronous>, transform_indices = @transform_1, window_bounds = array<i64: 256, 256>}, {pipeline_mode = #tpu.pipeline_mode<synchronous>, transform_indices = @transform_2, window_bounds = array<i64: 1, 256>}, {pipeline_mode = #tpu.pipeline_mode<synchronous>, transform_indices = @transform_3, window_bounds = array<i64: 512, 128>}, {pipeline_mode = #tpu.pipeline_mode<synchronous>, transform_indices = @transform_4, window_bounds = array<i64: 1, 128>}, {transform_indices = @transform_5, window_bounds = array<i64: 16, 128>}]} {
    %c0 = arith.constant 0 : index
    %c0_0 = arith.constant 0 : index
    %0 = vector.load %arg1[%c0, %c0_0] : memref<16x256xf32, #tpu.memory_space<vmem>>, vector<16x256xf32>
    %cst = arith.constant 0.000000e+00 : f32
    %1 = vector.broadcast %cst : f32 to vector<16x256xf32>
    %2 = arith.maximumf %0, %1 : vector<16x256xf32>
    %3 = arith.truncf %2 : vector<16x256xf32> to vector<16x256xbf16>
    %c0_1 = arith.constant 0 : index
    %c0_2 = arith.constant 0 : index
    %4 = vector.load %arg2[%c0_1, %c0_2] : memref<256x256xbf16, #tpu.memory_space<vmem>>, vector<256x256xbf16>
    %cst_3 = arith.constant dense<0.000000e+00> : vector<16x256xf32>
    %5 = tpu.matmul %3, %4, %cst_3 {dimension_numbers = #tpu.dot_dimension_numbers<[1], [0], [0], [1], [0, 0, 1, 1], [], []>} : vector<16x256xbf16>, vector<256x256xbf16>, vector<16x256xf32> -> vector<16x256xf32>
    %c0_4 = arith.constant 0 : index
    %c0_5 = arith.constant 0 : index
    %6 = vector.load %arg3[%c0_4, %c0_5] : memref<1x256xf32, #tpu.memory_space<vmem>>, vector<1x256xf32>
    %7 = vector.broadcast %6 : vector<1x256xf32> to vector<16x256xf32>
    %8 = arith.addf %5, %7 : vector<16x256xf32>
    %cst_6 = arith.constant 0.000000e+00 : f32
    %9 = vector.broadcast %cst_6 : f32 to vector<16x256xf32>
    %10 = arith.maximumf %8, %9 : vector<16x256xf32>
    %11 = tpu.concatenate %0, %10 in 1 : vector<16x256xf32>, vector<16x256xf32> -> vector<16x512xf32>
    %12 = arith.truncf %11 : vector<16x512xf32> to vector<16x512xbf16>
    %c0_7 = arith.constant 0 : index
    %c0_8 = arith.constant 0 : index
    %13 = vector.load %arg4[%c0_7, %c0_8] : memref<512x128xbf16, #tpu.memory_space<vmem>>, vector<512x128xbf16>
    %cst_9 = arith.constant dense<0.000000e+00> : vector<16x128xf32>
    %14 = tpu.matmul %12, %13, %cst_9 {dimension_numbers = #tpu.dot_dimension_numbers<[1], [0], [0], [1], [0, 0, 1, 1], [], []>} : vector<16x512xbf16>, vector<512x128xbf16>, vector<16x128xf32> -> vector<16x128xf32>
    %c0_10 = arith.constant 0 : index
    %c0_11 = arith.constant 0 : index
    %15 = vector.load %arg5[%c0_10, %c0_11] : memref<1x128xf32, #tpu.memory_space<vmem>>, vector<1x128xf32>
    %16 = vector.broadcast %15 : vector<1x128xf32> to vector<16x128xf32>
    %17 = arith.addf %14, %16 : vector<16x128xf32>
    %c0_12 = arith.constant 0 : index
    %c0_13 = arith.constant 0 : index
    %18 = vector.load %arg6[%c0_12, %c0_13] : memref<16x128xf32, #tpu.memory_space<vmem>>, vector<16x128xf32>
    tpu.vector_store %arg6[%c0_12, %c0_13], %17 {strides = array<i32>} : memref<16x128xf32, #tpu.memory_space<vmem>>, vector<16x128xf32>,
    return
  }
  func.func @transform_0(%arg0: i32) -> (i32, i32) {
    %c0_i32 = arith.constant 0 : i32
    %c0_i32_0 = arith.constant 0 : i32
    return %arg0, %c0_i32 : i32, i32
  }
  func.func @transform_1(%arg0: i32) -> (i32, i32) {
    %c0_i32 = arith.constant 0 : i32
    %c0_i32_0 = arith.constant 0 : i32
    %c0_i32_1 = arith.constant 0 : i32
    return %c0_i32, %c0_i32_0 : i32, i32
  }
  func.func @transform_2(%arg0: i32) -> (i32, i32) {
    %c0_i32 = arith.constant 0 : i32
    %c0_i32_0 = arith.constant 0 : i32
    %c0_i32_1 = arith.constant 0 : i32
    return %c0_i32, %c0_i32_0 : i32, i32
  }
  func.func @transform_3(%arg0: i32) -> (i32, i32) {
    %c0_i32 = arith.constant 0 : i32
    %c0_i32_0 = arith.constant 0 : i32
    %c0_i32_1 = arith.constant 0 : i32
    return %c0_i32, %c0_i32_0 : i32, i32
  }
  func.func @transform_4(%arg0: i32) -> (i32, i32) {
    %c0_i32 = arith.constant 0 : i32
    %c0_i32_0 = arith.constant 0 : i32
    %c0_i32_1 = arith.constant 0 : i32
    return %c0_i32, %c0_i32_0 : i32, i32
  }
  func.func @transform_5(%arg0: i32) -> (i32, i32) {
    %c0_i32 = arith.constant 0 : i32
    %c0_i32_0 = arith.constant 0 : i32
    return %arg0, %c0_i32 : i32, i32
  }
}

</mosaic_0001>

<llo_original>
// kernel: tpu_custom_call.1
$region0: #{tpu_custom_call.1}
  #allocation0 [shape = 'u32[]', space=smem, size = 0x4, offset = 0x4, fixed_abs, tag = 'smem constant byte address 0x4 - core index']
  #allocation1 [shape = 'u32[72,128]{1,0:T(1,128)}', space=vmem, size = 0x9000, scoped, tag = 'internal scratch']
  %s0 = inlined_call_operand.hbm [shape: f32[16,256], index: 0, kind: input, shape index: {}]
  %s1 = inlined_call_operand.hbm [shape: bf16[256,256], index: 1, kind: input, shape index: {}]
  %s2 = inlined_call_operand.hbm [shape: f32[1,256], index: 2, kind: input, shape index: {}]
  %s3 = inlined_call_operand.hbm [shape: bf16[512,128], index: 3, kind: input, shape index: {}]
  %s4 = inlined_call_operand.vmem [shape: f32[1,128], index: 4, kind: input, shape index: {}]
  %s5 = inlined_call_operand.hbm [shape: f32[16,128], index: 5, kind: output, shape index: {}]
  %s6 = sld [smem:[#allocation0]]
  $region46: #{tpu_custom_call.1} parent=0
    _
  %s8 = ssub.s32 1, %s6
  %s9 = scalar_select 0, %s8, %s6
  $region1: #{tpu_custom_call.1} parent=0
    #allocation2 [shape = 'u8[16384]{0}', space=vmem, size = 0x4000, scoped, tag = 'input window, operand 0, single buffered']
    #allocation3 [shape = 's32[1]{0}', space=sflag, size = 0x4, scoped, tag = 'scoped memory for tpu_custom_call.1']
    #allocation4 [shape = 's32[1]{0}', space=sflag, size = 0x4, scoped, tag = 'scoped memory for tpu_custom_call.1']
    #allocation5 [shape = 'u8[131072]{0}', space=vmem, size = 0x20000, scoped, tag = 'input window, operand 1, single buffered']
    #allocation6 [shape = 's32[1]{0}', space=sflag, size = 0x4, scoped, tag = 'scoped memory for tpu_custom_call.1']
    #allocation7 [shape = 'u8[1024]{0}', space=vmem, size = 0x400, scoped, tag = 'input window, operand 2, single buffered']
    #allocation8 [shape = 'u8[131072]{0}', space=vmem, size = 0x20000, scoped, tag = 'input window, operand 3, single buffered']
    #allocation9 [shape = 's32[1]{0}', space=sflag, size = 0x4, scoped, tag = 'scoped memory for tpu_custom_call.1']
    #allocation10 [shape = 'u8[8192]{0}', space=vmem, size = 0x2000, scoped, tag = 'output window, operand 0, single buffered']
    %10 = vsyncpa [#allocation3], 0
    %11 = vsyncpa [#allocation6], 0
    %12 = vsyncpa [#allocation9], 0
    %13 = vsyncpa [#allocation4], 0
    // Predicated region
    $region2: #{tpu_custom_call.1} parent=1 // pred_check
      _
    $region3: #{tpu_custom_call.1} parent=1 // pred_check_branch
      %15 = sbr.rel (0) target = $region5
    $region4: #{tpu_custom_call.1} parent=1 // pred_region
      %17 = vsyncadd [#allocation3], 0
      %s18 = sshll.u32 %s0, 4
      %s19 = int_to_ptr.hbm [resolvable:$true] %s18
      %s20 = sshll.u32 [#allocation2], 4
      %s21 = int_to_ptr.vmem [resolvable:$true] %s20
      %26 = dma.hbm_to_vmem [thread:$0]  %s19, 512, %s21, [#allocation3], 256, 256, 16
    $region5: #{tpu_custom_call.1} parent=1 // pred_fallthru
      _
    // Predicated region
    $region6: #{tpu_custom_call.1} parent=1 // pred_check
      _
    $region7: #{tpu_custom_call.1} parent=1 // pred_check_branch
      %28 = sbr.rel (0) target = $region9
    $region8: #{tpu_custom_call.1} parent=1 // pred_region
      %30 = vsyncadd [#allocation6], 0
      %s31 = sshll.u32 %s1, 4
      %s32 = int_to_ptr.hbm [resolvable:$true] %s31
      %s33 = sshll.u32 [#allocation5], 4
      %s34 = int_to_ptr.vmem [resolvable:$true] %s33
      %39 = dma.hbm_to_vmem [thread:$0]  %s32, 4096, %s34, [#allocation6], 128, 128, 8
    $region9: #{tpu_custom_call.1} parent=1 // pred_fallthru
      _
    // Predicated region
    $region10: #{tpu_custom_call.1} parent=1 // pred_check
      _
    $region11: #{tpu_custom_call.1} parent=1 // pred_check_branch
      %41 = sbr.rel (0) target = $region13
    $region12: #{tpu_custom_call.1} parent=1 // pred_region
      %43 = vsyncadd [#allocation6], 0
      %s45 = sshll.u32 %s2, 4
      %s46 = int_to_ptr.hbm [resolvable:$true] %s45
      %s47 = sshll.u32 [#allocation7], 4
      %s48 = int_to_ptr.vmem [resolvable:$true] %s47
      %50 = dma.hbm_to_vmem [thread:$0]  %s46, 32, %s48, [#allocation6]
    $region13: #{tpu_custom_call.1} parent=1 // pred_fallthru
      _
    // Predicated region
    $region14: #{tpu_custom_call.1} parent=1 // pred_check
      _
    $region15: #{tpu_custom_call.1} parent=1 // pred_check_branch
      %52 = sbr.rel (0) target = $region17
    $region16: #{tpu_custom_call.1} parent=1 // pred_region
      %54 = vsyncadd [#allocation9], 0
      %s55 = sshll.u32 %s3, 4
      %s56 = int_to_ptr.hbm [resolvable:$true] %s55
      %s57 = sshll.u32 [#allocation8], 4
      %s58 = int_to_ptr.vmem [resolvable:$true] %s57
      %63 = dma.hbm_to_vmem [thread:$0]  %s56, 4096, %s58, [#allocation9], 64, 64, 4
    $region17: #{tpu_custom_call.1} parent=1 // pred_fallthru
      _
    // Predicated region
    $region18: #{tpu_custom_call.1} parent=1 // pred_check
      _
    $region19: #{tpu_custom_call.1} parent=1 // pred_check_branch
      %65 = sbr.rel (0) target = $region21
    $region20: #{tpu_custom_call.1} parent=1 // pred_region
      _
    $region21: #{tpu_custom_call.1} parent=1 // pred_fallthru
      _
    // Predicated region
    $region22: #{tpu_custom_call.1} parent=1 // pred_check
      _
    $region23: #{tpu_custom_call.1} parent=1 // pred_check_branch
      %67 = sbr.rel (0) target = $region25
    $region24: #{tpu_custom_call.1} parent=1 // pred_region
      %69 = dma.done [#allocation3], 512
    $region25: #{tpu_custom_call.1} parent=1 // pred_fallthru
      _
    // Predicated region
    $region26: #{tpu_custom_call.1} parent=1 // pred_check
      _
    $region27: #{tpu_custom_call.1} parent=1 // pred_check_branch
      %71 = sbr.rel (0) target = $region29
    $region28: #{tpu_custom_call.1} parent=1 // pred_region
      %73 = dma.done [#allocation6], 4096
    $region29: #{tpu_custom_call.1} parent=1 // pred_fallthru
      _
    // Predicated region
    $region30: #{tpu_custom_call.1} parent=1 // pred_check
      _
    $region31: #{tpu_custom_call.1} parent=1 // pred_check_branch
      %75 = sbr.rel (0) target = $region33
    $region32: #{tpu_custom_call.1} parent=1 // pred_region
      %77 = dma.done [#allocation6], 32
    $region33: #{tpu_custom_call.1} parent=1 // pred_fallthru
      _
    // Predicated region
    $region34: #{tpu_custom_call.1} parent=1 // pred_check
      _
    $region35: #{tpu_custom_call.1} parent=1 // pred_check_branch
      %79 = sbr.rel (0) target = $region37
    $region36: #{tpu_custom_call.1} parent=1 // pred_region
      %81 = dma.done [#allocation9], 4096
    $region37: #{tpu_custom_call.1} parent=1 // pred_fallthru
      _
    %v82 = vld [vmem:[#allocation2] sm:$0xff]
    %v83 = vld [vmem:[#allocation2 + $0x8] sm:$0xff]
    %v84 = vld [vmem:[#allocation2 + $0x10] sm:$0xff]
    %v85 = vld [vmem:[#allocation2 + $0x18] sm:$0xff]
    %v86 = vmax.f32 %v82, 0.0
    %v87 = vmax.f32 %v83, 0.0
    %v88 = vmax.f32 %v84, 0.0
    %v89 = vmax.f32 %v85, 0.0
    %v90 = vpack.c.bf16 %v88, %v86
    %v91 = vpack.c.bf16 %v89, %v87
    %v92 = vld [vmem:[#allocation5] sm:$0xff]
    %v93 = vld [vmem:[#allocation5 + $0x8] sm:$0xff]
    %v94 = vld [vmem:[#allocation5 + $0x10] sm:$0xff]
    %v95 = vld [vmem:[#allocation5 + $0x18] sm:$0xff]
    %v96 = vld [vmem:[#allocation5 + $0x20] sm:$0xff]
    %v97 = vld [vmem:[#allocation5 + $0x28] sm:$0xff]
    %v98 = vld [vmem:[#allocation5 + $0x30] sm:$0xff]
    %v99 = vld [vmem:[#allocation5 + $0x38] sm:$0xff]
    %v100 = vld [vmem:[#allocation5 + $0x40] sm:$0xff]
    %v101 = vld [vmem:[#allocation5 + $0x48] sm:$0xff]
    %v102 = vld [vmem:[#allocation5 + $0x50] sm:$0xff]
    %v103 = vld [vmem:[#allocation5 + $0x58] sm:$0xff]
    %v104 = vld [vmem:[#allocation5 + $0x60] sm:$0xff]
    %v105 = vld [vmem:[#allocation5 + $0x68] sm:$0xff]
    %v106 = vld [vmem:[#allocation5 + $0x70] sm:$0xff]
    %v107 = vld [vmem:[#allocation5 + $0x78] sm:$0xff]
    %v108 = vld [vmem:[#allocation5 + $0x80] sm:$0xff]
    %v109 = vld [vmem:[#allocation5 + $0x88] sm:$0xff]
    %v110 = vld [vmem:[#allocation5 + $0x90] sm:$0xff]
    %v111 = vld [vmem:[#allocation5 + $0x98] sm:$0xff]
    %v112 = vld [vmem:[#allocation5 + $0xa0] sm:$0xff]
    %v113 = vld [vmem:[#allocation5 + $0xa8] sm:$0xff]
    %v114 = vld [vmem:[#allocation5 + $0xb0] sm:$0xff]
    %v115 = vld [vmem:[#allocation5 + $0xb8] sm:$0xff]
    %v116 = vld [vmem:[#allocation5 + $0xc0] sm:$0xff]
    %v117 = vld [vmem:[#allocation5 + $0xc8] sm:$0xff]
    %v118 = vld [vmem:[#allocation5 + $0xd0] sm:$0xff]
    %v119 = vld [vmem:[#allocation5 + $0xd8] sm:$0xff]
    %v120 = vld [vmem:[#allocation5 + $0xe0] sm:$0xff]
    %v121 = vld [vmem:[#allocation5 + $0xe8] sm:$0xff]
    %v122 = vld [vmem:[#allocation5 + $0xf0] sm:$0xff]
    %v123 = vld [vmem:[#allocation5 + $0xf8] sm:$0xff]
    %v124 = vld [vmem:[#allocation7] sm:$0x3]
    %v126 = vperm.slane %v124, 0
    %v127 = vperm.slane %v124, 1
    %v162 = vunpack.c.l.b16 %v92
    %v163 = vunpack.c.h.b16 %v92
    %v164 = vunpack.c.l.b16 %v93
    %v165 = vunpack.c.h.b16 %v93
    %v166 = vunpack.c.l.b16 %v94
    %v167 = vunpack.c.h.b16 %v94
    %v168 = vunpack.c.l.b16 %v95
    %v169 = vunpack.c.h.b16 %v95
    %v170 = vunpack.c.l.b16 %v96
    %v171 = vunpack.c.h.b16 %v96
    %v172 = vunpack.c.l.b16 %v97
    %v173 = vunpack.c.h.b16 %v97
    %v174 = vunpack.c.l.b16 %v98
    %v175 = vunpack.c.h.b16 %v98
    %v176 = vunpack.c.l.b16 %v99
    %v177 = vunpack.c.h.b16 %v99
    %v178 = vunpack.c.l.b16 %v100
    %v179 = vunpack.c.h.b16 %v100
    %v180 = vunpack.c.l.b16 %v101
    %v181 = vunpack.c.h.b16 %v101
    %v182 = vunpack.c.l.b16 %v102
    %v183 = vunpack.c.h.b16 %v102
    %v184 = vunpack.c.l.b16 %v103
    %v185 = vunpack.c.h.b16 %v103
    %v186 = vunpack.c.l.b16 %v104
    %v187 = vunpack.c.h.b16 %v104
    %v188 = vunpack.c.l.b16 %v105
    %v189 = vunpack.c.h.b16 %v105
    %v190 = vunpack.c.l.b16 %v106
    %v191 = vunpack.c.h.b16 %v106
    %v192 = vunpack.c.l.b16 %v107
    %v193 = vunpack.c.h.b16 %v107
    %v194 = vunpack.c.l.b16 %v108
    %v195 = vunpack.c.h.b16 %v108
    %v196 = vunpack.c.l.b16 %v109
    %v197 = vunpack.c.h.b16 %v109
    %v198 = vunpack.c.l.b16 %v110
    %v199 = vunpack.c.h.b16 %v110
    %v200 = vunpack.c.l.b16 %v111
    %v201 = vunpack.c.h.b16 %v111
    %v202 = vunpack.c.l.b16 %v112
    %v203 = vunpack.c.h.b16 %v112
    %v204 = vunpack.c.l.b16 %v113
    %v205 = vunpack.c.h.b16 %v113
    %v206 = vunpack.c.l.b16 %v114
    %v207 = vunpack.c.h.b16 %v114
    %v208 = vunpack.c.l.b16 %v115
    %v209 = vunpack.c.h.b16 %v115
    %v210 = vunpack.c.l.b16 %v116
    %v211 = vunpack.c.h.b16 %v116
    %v212 = vunpack.c.l.b16 %v117
    %v213 = vunpack.c.h.b16 %v117
    %v214 = vunpack.c.l.b16 %v118
    %v215 = vunpack.c.h.b16 %v118
    %v216 = vunpack.c.l.b16 %v119
    %v217 = vunpack.c.h.b16 %v119
    %v218 = vunpack.c.l.b16 %v120
    %v219 = vunpack.c.h.b16 %v120
    %v220 = vunpack.c.l.b16 %v121
    %v221 = vunpack.c.h.b16 %v121
    %v222 = vunpack.c.l.b16 %v122
    %v223 = vunpack.c.h.b16 %v122
    %v224 = vunpack.c.l.b16 %v123
    %v225 = vunpack.c.h.b16 %v123
    %v226 = vpack.c.b16 %v164, %v162
    %v227 = vpack.c.b16 %v165, %v163
    %v228 = vpack.c.b16 %v168, %v166
    %v229 = vpack.c.b16 %v169, %v167
    %v230 = vpack.c.b16 %v172, %v170
    %v231 = vpack.c.b16 %v173, %v171
    %v232 = vpack.c.b16 %v176, %v174
    %v233 = vpack.c.b16 %v177, %v175
    %v234 = vpack.c.b16 %v180, %v178
    %v235 = vpack.c.b16 %v181, %v179
    %v236 = vpack.c.b16 %v184, %v182
    %v237 = vpack.c.b16 %v185, %v183
    %v238 = vpack.c.b16 %v188, %v186
    %v239 = vpack.c.b16 %v189, %v187
    %v240 = vpack.c.b16 %v192, %v190
    %v241 = vpack.c.b16 %v193, %v191
    %v242 = vpack.c.b16 %v196, %v194
    %v243 = vpack.c.b16 %v197, %v195
    %v244 = vpack.c.b16 %v200, %v198
    %v245 = vpack.c.b16 %v201, %v199
    %v246 = vpack.c.b16 %v204, %v202
    %v247 = vpack.c.b16 %v205, %v203
    %v248 = vpack.c.b16 %v208, %v206
    %v249 = vpack.c.b16 %v209, %v207
    %v250 = vpack.c.b16 %v212, %v210
    %v251 = vpack.c.b16 %v213, %v211
    %v252 = vpack.c.b16 %v216, %v214
    %v253 = vpack.c.b16 %v217, %v215
    %v254 = vpack.c.b16 %v220, %v218
    %v255 = vpack.c.b16 %v221, %v219
    %v256 = vpack.c.b16 %v224, %v222
    %v257 = vpack.c.b16 %v225, %v223
    %290 = vmatpush.bf16.msra.mxu0 %v240
    %291 = vmatpush.bf16.msra.mxu0 %v238
    %292 = vmatpush.bf16.msra.mxu0 %v236
    %293 = vmatpush.bf16.msra.mxu0 %v234
    %294 = vmatpush.bf16.msra.mxu0 %v232
    %295 = vmatpush.bf16.msra.mxu0 %v230
    %296 = vmatpush.bf16.msra.mxu0 %v228
    %297 = vmatpush.bf16.msra.mxu0 %v226
    %298 = vmatmul.bf16.gmra.mxu0 %v90
    %v299 = vpop.f32.mrf.mxu0
    %v300 = vadd.f32 %v126, %v299
    %v301 = vpop.f32.mrf.mxu0
    %v302 = vadd.f32 %v126, %v301
    %303 = vdwg.mxu0
    %304 = vmatpush.bf16.msra.mxu0 %v256
    %305 = vmatpush.bf16.msra.mxu0 %v254
    %306 = vmatpush.bf16.msra.mxu0 %v252
    %307 = vmatpush.bf16.msra.mxu0 %v250
    %308 = vmatpush.bf16.msra.mxu0 %v248
    %309 = vmatpush.bf16.msra.mxu0 %v246
    %310 = vmatpush.bf16.msra.mxu0 %v244
    %311 = vmatpush.bf16.msra.mxu0 %v242
    %312 = vmatmul.bf16.gmra.mxu0 %v91
    %v313 = vpop.f32.mrf.mxu0
    %v314 = vadd.f32 %v300, %v313
    %v315 = vpop.f32.mrf.mxu0
    %v316 = vadd.f32 %v302, %v315
    %317 = vdwg.mxu0
    %318 = vmatpush.bf16.msra.mxu0 %v241
    %319 = vmatpush.bf16.msra.mxu0 %v239
    %320 = vmatpush.bf16.msra.mxu0 %v237
    %321 = vmatpush.bf16.msra.mxu0 %v235
    %322 = vmatpush.bf16.msra.mxu0 %v233
    %323 = vmatpush.bf16.msra.mxu0 %v231
    %324 = vmatpush.bf16.msra.mxu0 %v229
    %325 = vmatpush.bf16.msra.mxu0 %v227
    %326 = vmatmul.bf16.gmra.mxu0 %v90
    %v327 = vpop.f32.mrf.mxu0
    %v328 = vadd.f32 %v127, %v327
    %v329 = vpop.f32.mrf.mxu0
    %v330 = vadd.f32 %v127, %v329
    %331 = vdwg.mxu0
    %332 = vmatpush.bf16.msra.mxu0 %v257
    %333 = vmatpush.bf16.msra.mxu0 %v255
    %334 = vmatpush.bf16.msra.mxu0 %v253
    %335 = vmatpush.bf16.msra.mxu0 %v251
    %336 = vmatpush.bf16.msra.mxu0 %v249
    %337 = vmatpush.bf16.msra.mxu0 %v247
    %338 = vmatpush.bf16.msra.mxu0 %v245
    %339 = vmatpush.bf16.msra.mxu0 %v243
    %340 = vmatmul.bf16.gmra.mxu0 %v91
    %v341 = vpop.f32.mrf.mxu0
    %v342 = vadd.f32 %v328, %v341
    %v343 = vpop.f32.mrf.mxu0
    %v344 = vadd.f32 %v330, %v343
    %345 = vdwg.mxu0
    %v346 = vmax.f32 %v314, 0.0
    %v347 = vmax.f32 %v342, 0.0
    %v348 = vmax.f32 %v316, 0.0
    %v349 = vmax.f32 %v344, 0.0
    %v350 = vpack.c.bf16 %v84, %v82
    %v351 = vpack.c.bf16 %v85, %v83
    %v352 = vpack.c.bf16 %v348, %v346
    %v353 = vpack.c.bf16 %v349, %v347
    %v354 = vld [vmem:[#allocation8] sm:$0xf]
    %v355 = vld [vmem:[#allocation8 + $0x4] sm:$0xf]
    %v356 = vld [vmem:[#allocation8 + $0x8] sm:$0xf]
    %v357 = vld [vmem:[#allocation8 + $0xc] sm:$0xf]
    %v358 = vld [vmem:[#allocation8 + $0x10] sm:$0xf]
    %v359 = vld [vmem:[#allocation8 + $0x14] sm:$0xf]
    %v360 = vld [vmem:[#allocation8 + $0x18] sm:$0xf]
    %v361 = vld [vmem:[#allocation8 + $0x1c] sm:$0xf]
    %v362 = vld [vmem:[#allocation8 + $0x20] sm:$0xf]
    %v363 = vld [vmem:[#allocation8 + $0x24] sm:$0xf]
    %v364 = vld [vmem:[#allocation8 + $0x28] sm:$0xf]
    %v365 = vld [vmem:[#allocation8 + $0x2c] sm:$0xf]
    %v366 = vld [vmem:[#allocation8 + $0x30] sm:$0xf]
    %v367 = vld [vmem:[#allocation8 + $0x34] sm:$0xf]
    %v368 = vld [vmem:[#allocation8 + $0x38] sm:$0xf]
    %v369 = vld [vmem:[#allocation8 + $0x3c] sm:$0xf]
    %v370 = vld [vmem:[#allocation8 + $0x40] sm:$0xf]
    %v371 = vld [vmem:[#allocation8 + $0x44] sm:$0xf]
    %v372 = vld [vmem:[#allocation8 + $0x48] sm:$0xf]
    %v373 = vld [vmem:[#allocation8 + $0x4c] sm:$0xf]
    %v374 = vld [vmem:[#allocation8 + $0x50] sm:$0xf]
    %v375 = vld [vmem:[#allocation8 + $0x54] sm:$0xf]
    %v376 = vld [vmem:[#allocation8 + $0x58] sm:$0xf]
    %v377 = vld [vmem:[#allocation8 + $0x5c] sm:$0xf]
    %v378 = vld [vmem:[#allocation8 + $0x60] sm:$0xf]
    %v379 = vld [vmem:[#allocation8 + $0x64] sm:$0xf]
    %v380 = vld [vmem:[#allocation8 + $0x68] sm:$0xf]
    %v381 = vld [vmem:[#allocation8 + $0x6c] sm:$0xf]
    %v382 = vld [vmem:[#allocation8 + $0x70] sm:$0xf]
    %v383 = vld [vmem:[#allocation8 + $0x74] sm:$0xf]
    %v384 = vld [vmem:[#allocation8 + $0x78] sm:$0xf]
    %v385 = vld [vmem:[#allocation8 + $0x7c] sm:$0xf]
    %v386 = vld [vmem:[#allocation8 + $0x80] sm:$0xf]
    %v387 = vld [vmem:[#allocation8 + $0x84] sm:$0xf]
    %v388 = vld [vmem:[#allocation8 + $0x88] sm:$0xf]
    %v389 = vld [vmem:[#allocation8 + $0x8c] sm:$0xf]
    %v390 = vld [vmem:[#allocation8 + $0x90] sm:$0xf]
    %v391 = vld [vmem:[#allocation8 + $0x94] sm:$0xf]
    %v392 = vld [vmem:[#allocation8 + $0x98] sm:$0xf]
    %v393 = vld [vmem:[#allocation8 + $0x9c] sm:$0xf]
    %v394 = vld [vmem:[#allocation8 + $0xa0] sm:$0xf]
    %v395 = vld [vmem:[#allocation8 + $0xa4] sm:$0xf]
    %v396 = vld [vmem:[#allocation8 + $0xa8] sm:$0xf]
    %v397 = vld [vmem:[#allocation8 + $0xac] sm:$0xf]
    %v398 = vld [vmem:[#allocation8 + $0xb0] sm:$0xf]
    %v399 = vld [vmem:[#allocation8 + $0xb4] sm:$0xf]
    %v400 = vld [vmem:[#allocation8 + $0xb8] sm:$0xf]
    %v401 = vld [vmem:[#allocation8 + $0xbc] sm:$0xf]
    %v402 = vld [vmem:[#allocation8 + $0xc0] sm:$0xf]
    %v403 = vld [vmem:[#allocation8 + $0xc4] sm:$0xf]
    %v404 = vld [vmem:[#allocation8 + $0xc8] sm:$0xf]
    %v405 = vld [vmem:[#allocation8 + $0xcc] sm:$0xf]
    %v406 = vld [vmem:[#allocation8 + $0xd0] sm:$0xf]
    %v407 = vld [vmem:[#allocation8 + $0xd4] sm:$0xf]
    %v408 = vld [vmem:[#allocation8 + $0xd8] sm:$0xf]
    %v409 = vld [vmem:[#allocation8 + $0xdc] sm:$0xf]
    %v410 = vld [vmem:[#allocation8 + $0xe0] sm:$0xf]
    %v411 = vld [vmem:[#allocation8 + $0xe4] sm:$0xf]
    %v412 = vld [vmem:[#allocation8 + $0xe8] sm:$0xf]
    %v413 = vld [vmem:[#allocation8 + $0xec] sm:$0xf]
    %v414 = vld [vmem:[#allocation8 + $0xf0] sm:$0xf]
    %v415 = vld [vmem:[#allocation8 + $0xf4] sm:$0xf]
    %v416 = vld [vmem:[#allocation8 + $0xf8] sm:$0xf]
    %v417 = vld [vmem:[#allocation8 + $0xfc] sm:$0xf]
    %v418 = vld [vmem:[%s4] sm:$0x1]
    %v420 = vperm.slane %v418, 0
    %v486 = vunpack.c.l.b16 %v354
    %v487 = vunpack.c.l.b16 %v355
    %v488 = vunpack.c.l.b16 %v356
    %v489 = vunpack.c.l.b16 %v357
    %v490 = vunpack.c.l.b16 %v358
    %v491 = vunpack.c.l.b16 %v359
    %v492 = vunpack.c.l.b16 %v360
    %v493 = vunpack.c.l.b16 %v361
    %v494 = vunpack.c.l.b16 %v362
    %v495 = vunpack.c.l.b16 %v363
    %v496 = vunpack.c.l.b16 %v364
    %v497 = vunpack.c.l.b16 %v365
    %v498 = vunpack.c.l.b16 %v366
    %v499 = vunpack.c.l.b16 %v367
    %v500 = vunpack.c.l.b16 %v368
    %v501 = vunpack.c.l.b16 %v369
    %v502 = vunpack.c.l.b16 %v370
    %v503 = vunpack.c.l.b16 %v371
    %v504 = vunpack.c.l.b16 %v372
    %v505 = vunpack.c.l.b16 %v373
    %v506 = vunpack.c.l.b16 %v374
    %v507 = vunpack.c.l.b16 %v375
    %v508 = vunpack.c.l.b16 %v376
    %v509 = vunpack.c.l.b16 %v377
    %v510 = vunpack.c.l.b16 %v378
    %v511 = vunpack.c.l.b16 %v379
    %v512 = vunpack.c.l.b16 %v380
    %v513 = vunpack.c.l.b16 %v381
    %v514 = vunpack.c.l.b16 %v382
    %v515 = vunpack.c.l.b16 %v383
    %v516 = vunpack.c.l.b16 %v384
    %v517 = vunpack.c.l.b16 %v385
    %v518 = vunpack.c.l.b16 %v386
    %v519 = vunpack.c.l.b16 %v387
    %v520 = vunpack.c.l.b16 %v388
    %v521 = vunpack.c.l.b16 %v389
    %v522 = vunpack.c.l.b16 %v390
    %v523 = vunpack.c.l.b16 %v391
    %v524 = vunpack.c.l.b16 %v392
    %v525 = vunpack.c.l.b16 %v393
    %v526 = vunpack.c.l.b16 %v394
    %v527 = vunpack.c.l.b16 %v395
    %v528 = vunpack.c.l.b16 %v396
    %v529 = vunpack.c.l.b16 %v397
    %v530 = vunpack.c.l.b16 %v398
    %v531 = vunpack.c.l.b16 %v399
    %v532 = vunpack.c.l.b16 %v400
    %v533 = vunpack.c.l.b16 %v401
    %v534 = vunpack.c.l.b16 %v402
    %v535 = vunpack.c.l.b16 %v403
    %v536 = vunpack.c.l.b16 %v404
    %v537 = vunpack.c.l.b16 %v405
    %v538 = vunpack.c.l.b16 %v406
    %v539 = vunpack.c.l.b16 %v407
    %v540 = vunpack.c.l.b16 %v408
    %v541 = vunpack.c.l.b16 %v409
    %v542 = vunpack.c.l.b16 %v410
    %v543 = vunpack.c.l.b16 %v411
    %v544 = vunpack.c.l.b16 %v412
    %v545 = vunpack.c.l.b16 %v413
    %v546 = vunpack.c.l.b16 %v414
    %v547 = vunpack.c.l.b16 %v415
    %v548 = vunpack.c.l.b16 %v416
    %v549 = vunpack.c.l.b16 %v417
    %v550 = vpack.c.b16 %v487, %v486
    %v551 = vpack.c.b16 %v489, %v488
    %v552 = vpack.c.b16 %v491, %v490
    %v553 = vpack.c.b16 %v493, %v492
    %v554 = vpack.c.b16 %v495, %v494
    %v555 = vpack.c.b16 %v497, %v496
    %v556 = vpack.c.b16 %v499, %v498
    %v557 = vpack.c.b16 %v501, %v500
    %v558 = vpack.c.b16 %v503, %v502
    %v559 = vpack.c.b16 %v505, %v504
    %v560 = vpack.c.b16 %v507, %v506
    %v561 = vpack.c.b16 %v509, %v508
    %v562 = vpack.c.b16 %v511, %v510
    %v563 = vpack.c.b16 %v513, %v512
    %v564 = vpack.c.b16 %v515, %v514
    %v565 = vpack.c.b16 %v517, %v516
    %v566 = vpack.c.b16 %v519, %v518
    %v567 = vpack.c.b16 %v521, %v520
    %v568 = vpack.c.b16 %v523, %v522
    %v569 = vpack.c.b16 %v525, %v524
    %v570 = vpack.c.b16 %v527, %v526
    %v571 = vpack.c.b16 %v529, %v528
    %v572 = vpack.c.b16 %v531, %v530
    %v573 = vpack.c.b16 %v533, %v532
    %v574 = vpack.c.b16 %v535, %v534
    %v575 = vpack.c.b16 %v537, %v536
    %v576 = vpack.c.b16 %v539, %v538
    %v577 = vpack.c.b16 %v541, %v540
    %v578 = vpack.c.b16 %v543, %v542
    %v579 = vpack.c.b16 %v545, %v544
    %v580 = vpack.c.b16 %v547, %v546
    %v581 = vpack.c.b16 %v549, %v548
    %614 = vmatpush.bf16.msra.mxu0 %v557
    %615 = vmatpush.bf16.msra.mxu0 %v556
    %616 = vmatpush.bf16.msra.mxu0 %v555
    %617 = vmatpush.bf16.msra.mxu0 %v554
    %618 = vmatpush.bf16.msra.mxu0 %v553
    %619 = vmatpush.bf16.msra.mxu0 %v552
    %620 = vmatpush.bf16.msra.mxu0 %v551
    %621 = vmatpush.bf16.msra.mxu0 %v550
    %622 = vmatmul.bf16.gmra.mxu0 %v350
    %v623 = vpop.f32.mrf.mxu0
    %v624 = vadd.f32 %v420, %v623
    %v625 = vpop.f32.mrf.mxu0
    %v626 = vadd.f32 %v420, %v625
    %627 = vdwg.mxu0
    %628 = vmatpush.bf16.msra.mxu0 %v565
    %629 = vmatpush.bf16.msra.mxu0 %v564
    %630 = vmatpush.bf16.msra.mxu0 %v563
    %631 = vmatpush.bf16.msra.mxu0 %v562
    %632 = vmatpush.bf16.msra.mxu0 %v561
    %633 = vmatpush.bf16.msra.mxu0 %v560
    %634 = vmatpush.bf16.msra.mxu0 %v559
    %635 = vmatpush.bf16.msra.mxu0 %v558
    %636 = vmatmul.bf16.gmra.mxu0 %v351
    %v637 = vpop.f32.mrf.mxu0
    %v638 = vadd.f32 %v624, %v637
    %v639 = vpop.f32.mrf.mxu0
    %v640 = vadd.f32 %v626, %v639
    %641 = vdwg.mxu0
    %642 = vmatpush.bf16.msra.mxu0 %v573
    %643 = vmatpush.bf16.msra.mxu0 %v572
    %644 = vmatpush.bf16.msra.mxu0 %v571
    %645 = vmatpush.bf16.msra.mxu0 %v570
    %646 = vmatpush.bf16.msra.mxu0 %v569
    %647 = vmatpush.bf16.msra.mxu0 %v568
    %648 = vmatpush.bf16.msra.mxu0 %v567
    %649 = vmatpush.bf16.msra.mxu0 %v566
    %650 = vmatmul.bf16.gmra.mxu0 %v352
    %v651 = vpop.f32.mrf.mxu0
    %v652 = vadd.f32 %v638, %v651
    %v653 = vpop.f32.mrf.mxu0
    %v654 = vadd.f32 %v640, %v653
    %655 = vdwg.mxu0
    %656 = vmatpush.bf16.msra.mxu0 %v581
    %657 = vmatpush.bf16.msra.mxu0 %v580
    %658 = vmatpush.bf16.msra.mxu0 %v579
    %659 = vmatpush.bf16.msra.mxu0 %v578
    %660 = vmatpush.bf16.msra.mxu0 %v577
    %661 = vmatpush.bf16.msra.mxu0 %v576
    %662 = vmatpush.bf16.msra.mxu0 %v575
    %663 = vmatpush.bf16.msra.mxu0 %v574
    %664 = vmatmul.bf16.gmra.mxu0 %v353
    %v665 = vpop.f32.mrf.mxu0
    %v666 = vadd.f32 %v652, %v665
    %v667 = vpop.f32.mrf.mxu0
    %v668 = vadd.f32 %v654, %v667
    %669 = vdwg.mxu0
    %670 = vst [vmem:[#allocation10] sm:$0xff] %v666
    %671 = vst [vmem:[#allocation10 + $0x8] sm:$0xff] %v668
    // Predicated region
    $region38: #{tpu_custom_call.1} parent=1 // pred_check
      _
    $region39: #{tpu_custom_call.1} parent=1 // pred_check_branch
      %673 = sbr.rel (0) target = $region41
    $region40: #{tpu_custom_call.1} parent=1 // pred_region
      %675 = vsyncadd [#allocation4], 0
      %s676 = sshll.u32 [#allocation10], 4
      %s677 = int_to_ptr.vmem [resolvable:$true] %s676
      %s678 = sshll.u32 %s5, 4
      %s679 = int_to_ptr.hbm [resolvable:$true] %s678
      %684 = dma.vmem_to_hbm [thread:$0]  %s677, 256, %s679, [#allocation4], 128, 128, 8
    $region41: #{tpu_custom_call.1} parent=1 // pred_fallthru
      _
    // Predicated region
    $region42: #{tpu_custom_call.1} parent=1 // pred_check
      _
    $region43: #{tpu_custom_call.1} parent=1 // pred_check_branch
      %686 = sbr.rel (0) target = $region45
    $region44: #{tpu_custom_call.1} parent=1 // pred_region
      %688 = dma.done [#allocation4], 256
    $region45: #{tpu_custom_call.1} parent=1 // pred_fallthru
      _
    %689 = vsyncpa [#allocation3], 1
    %690 = vsyncpa [#allocation6], 1
    %691 = vsyncpa [#allocation9], 1
    %692 = vsyncpa [#allocation4], 1

</llo_original>
